<compile_context>
chip_gen: v5e
topology: v5e:2x2
jax: 0.10.0
libtpu: 0.0.40
codegen_flags: <defaults>
</compile_context>

<pallas_src>
import functools

import jax
import jax.numpy as jnp
from jax import lax
from jax.experimental import pallas as pl
from jax.experimental.pallas import tpu as pltpu

IN_DIM = 28 * 28   # 784
H1 = 256
H2 = 128
OUT_DIM = 10
LANE_OUT = 128     # logits padded to a full lane width (dense vst)
MAX_TILE_B = 1024  # overhead-bound below ~512 rows; VMEM is tiny even at 1024


def _round_up(x, m):
    return ((x + m - 1) // m) * m


def mlp_logsoftmax_kernel(x_ref, w1_ref, w2_ref, w3_ref, o_ref):
    # x_ref : (TILE_B, 784)   caller dtype (f32 or bf16); cast in VMEM, not in HBM
    # w1_ref: (784, 256)      pre-transposed (in, out) layout
    # w2_ref: (256, 128)
    # w3_ref: (128, 128)      columns >= 10 are zero padding
    # o_ref : (TILE_B, 128)   compute dtype; columns >= 10 hold ~-1e30 sentinels
    x = x_ref[...].astype(w1_ref.dtype)

    h1 = jnp.dot(x, w1_ref[...], preferred_element_type=jnp.float32)
    h1 = jnp.maximum(h1, 0.0)                                   # ReLU

    h2 = jnp.dot(h1.astype(w2_ref.dtype), w2_ref[...],
                 preferred_element_type=jnp.float32)
    h2 = jnp.maximum(h2, 0.0)                                   # ReLU

    logits = jnp.dot(h2.astype(w3_ref.dtype), w3_ref[...],
                     preferred_element_type=jnp.float32)        # (TILE_B, 128)

    # Row-wise log-softmax over the first OUT_DIM lanes.  Pad lanes are pushed
    # to -1e30 so exp(shifted) underflows to exactly 0 — no extra select.
    lane = lax.broadcasted_iota(jnp.int32, logits.shape, 1)
    masked = jnp.where(lane < OUT_DIM, logits, jnp.float32(-1e30))
    m = jnp.max(masked, axis=1, keepdims=True)
    shifted = masked - m
    ssum = jnp.sum(jnp.exp(shifted), axis=1, keepdims=True)
    o_ref[...] = (shifted - jnp.log(ssum)).astype(o_ref.dtype)


def prepare_weights(w1, w2, w3, compute_dtype=jnp.float32):
    """One-time weight prep (do this OUTSIDE the per-step forward).

    Transposes PyTorch (out, in) weights to lane-dense (in, out) once, pads
    l3's output dim from 10 to 128 with zero columns (dense final matmul and
    unmasked stores), and casts to the compute dtype.  bf16 is recommended on
    v5e, v6e and v7x alike: the MXU runs bf16 at full rate and all
    accumulation / ReLU / log-softmax happens in f32 regardless."""
    w1t = w1.T                                                      # (784, 256)
    w2t = w2.T                                                      # (256, 128)
    w3t = jnp.zeros((H2, LANE_OUT), dtype=w3.dtype).at[:, :OUT_DIM].set(w3.T)
    return (w1t.astype(compute_dtype),
            w2t.astype(compute_dtype),
            w3t.astype(compute_dtype))


@functools.partial(jax.jit, static_argnames=("tile_b",))
def net_forward(x, params, tile_b=None):
    """x: (B, 784) float array. params: output of prepare_weights.

    Returns (B, 10) log-probabilities in the compute dtype of `params`."""
    w1t, w2t, w3t = params
    B = x.shape[0]
    out_dtype = w1t.dtype

    if tile_b is None:
        if B <= 8:
            tile_b = B                      # single tile == full batch dim
        else:
            # >= 2 grid steps so v7x's two TensorCores both get work; tile is
            # a multiple of 8 sublanes, capped at MAX_TILE_B rows.  Working
            # set stays at a few MB, so no vmem_limit_bytes override needed.
            tile_b = min(MAX_TILE_B, _round_up(pl.cdiv(B, 2), 8))

    grid = (pl.cdiv(B, tile_b),)            # partial last block handled by Pallas

    x_item = jnp.dtype(x.dtype).itemsize
    w_item = jnp.dtype(out_dtype).itemsize
    cost = pl.CostEstimate(
        flops=2 * B * (IN_DIM * H1 + H1 * H2 + H2 * LANE_OUT),
        transcendentals=B * (LANE_OUT + 1),                     # exp + log per row
        bytes_accessed=int(B * IN_DIM * x_item
                           + (IN_DIM * H1 + H1 * H2 + H2 * LANE_OUT) * w_item
                           + B * LANE_OUT * w_item),
    )

    out = pl.pallas_call(
        mlp_logsoftmax_kernel,
        out_shape=jax.ShapeDtypeStruct((B, LANE_OUT), out_dtype),
        grid_spec=pltpu.PrefetchScalarGridSpec(
            num_scalar_prefetch=0,
            grid=grid,
            in_specs=[
                pl.BlockSpec((tile_b, IN_DIM), lambda i: (i, 0)),   # x tile, pipelined
                pl.BlockSpec((IN_DIM, H1), lambda i: (0, 0)),       # weights VMEM-resident
                pl.BlockSpec((H1, H2), lambda i: (0, 0)),
                pl.BlockSpec((H2, LANE_OUT), lambda i: (0, 0)),
            ],
            out_specs=pl.BlockSpec((tile_b, LANE_OUT), lambda i: (i, 0)),
        ),
        compiler_params=pltpu.CompilerParams(
            dimension_semantics=("parallel",),                      # v7x: 2 TCs
        ),
        cost_estimate=cost,
    )(x, w1t, w2t, w3t)

    # TODO(synk): a downstream NLL/argmax consumer could read the padded
    # 128-wide slab directly (or be fused into the kernel) to avoid this slice.
    return out[:, :OUT_DIM]


def _reference(x, w1, w2, w3):
    h = jnp.maximum(x @ w1.T, 0.0)
    h = jnp.maximum(h @ w2.T, 0.0)
    logits = h @ w3.T
    return logits - jax.scipy.special.logsumexp(logits, axis=1, keepdims=True)


if __name__ == "__main__":
    key = jax.random.PRNGKey(0)
    kx, k1, k2, k3, kx2 = jax.random.split(key, 5)

    # PyTorch nn.Linear weight layout: (out, in)
    w1 = jax.random.normal(k1, (H1, IN_DIM), dtype=jnp.float32) * (1.0 / jnp.sqrt(IN_DIM))
    w2 = jax.random.normal(k2, (H2, H1), dtype=jnp.float32) * (1.0 / jnp.sqrt(H1))
    w3 = jax.random.normal(k3, (OUT_DIM, H2), dtype=jnp.float32) * (1.0 / jnp.sqrt(H2))

    # --- small-batch f32 check (tight tolerance) -----------------------------
    B = 8
    x = jax.random.normal(kx, (B, IN_DIM), dtype=jnp.float32)
    params_f32 = prepare_weights(w1, w2, w3, compute_dtype=jnp.float32)
    out = net_forward(x, params_f32)
    jax.block_until_ready(out)

    ref = _reference(x, w1, w2, w3)
    assert out.shape == (B, OUT_DIM)
    assert jnp.allclose(out, ref, atol=1e-4, rtol=1e-4), float(jnp.max(jnp.abs(out - ref)))

    # --- larger, non-tile-aligned batch on the bf16 path: exercises the cdiv
    #     grid with a partial last block, the in-kernel cast, and the bf16
    #     output writeback (loose tolerance) -----------------------------------
    B2 = 260  # 3 grid steps of 128 rows, last block only 4 rows valid
    x2 = jax.random.normal(kx2, (B2, IN_DIM), dtype=jnp.float32)
    params_bf16 = prepare_weights(w1, w2, w3, compute_dtype=jnp.bfloat16)
    out2 = net_forward(x2, params_bf16, tile_b=128)
    jax.block_until_ready(out2)

    ref2 = _reference(x2, w1, w2, w3)
    assert out2.shape == (B2, OUT_DIM)
    out2_f32 = out2.astype(jnp.float32)
    assert bool(jnp.all(jnp.isfinite(out2_f32)))
    assert jnp.allclose(out2_f32, ref2, atol=0.25, rtol=0.1), \
        float(jnp.max(jnp.abs(out2_f32 - ref2)))

    # --- default tile heuristic path (>= 2 grid steps, partial last block) ----
    out3 = net_forward(x2, params_f32)
    jax.block_until_ready(out3)
    assert out3.shape == (B2, OUT_DIM)
    assert jnp.allclose(out3, ref2, atol=1e-4, rtol=1e-4), \
        float(jnp.max(jnp.abs(out3 - ref2)))

    print("KERNEL_OK")
</pallas_src>

<mosaic_0001>
module attributes {stable_mosaic.version = 11 : i64} {
  func.func @mlp_logsoftmax_kernel(%arg0: i32, %arg1: memref<8x784xf32, #tpu.memory_space<vmem>>, %arg2: memref<784x256xf32, #tpu.memory_space<vmem>>, %arg3: memref<256x128xf32, #tpu.memory_space<vmem>>, %arg4: memref<128x128xf32, #tpu.memory_space<vmem>>, %arg5: memref<8x128xf32, #tpu.memory_space<vmem>>) attributes {dimension_semantics = [#tpu.dimension_semantics<parallel>], iteration_bounds = array<i64: 1>, scalar_prefetch = 0 : i64, scratch_operands = 0 : i64, tpu.core_type = #tpu.core_type<tc>, window_params = [{transform_indices = @transform_0, window_bounds = array<i64: 8, 784>}, {pipeline_mode = #tpu.pipeline_mode<synchronous>, transform_indices = @transform_1, window_bounds = array<i64: 784, 256>}, {pipeline_mode = #tpu.pipeline_mode<synchronous>, transform_indices = @transform_2, window_bounds = array<i64: 256, 128>}, {pipeline_mode = #tpu.pipeline_mode<synchronous>, transform_indices = @transform_3, window_bounds = array<i64: 128, 128>}, {transform_indices = @transform_4, window_bounds = array<i64: 8, 128>}]} {
    %c0 = arith.constant 0 : index
    %c0_0 = arith.constant 0 : index
    %0 = vector.load %arg1[%c0, %c0_0] : memref<8x784xf32, #tpu.memory_space<vmem>>, vector<8x784xf32>
    %c0_1 = arith.constant 0 : index
    %c0_2 = arith.constant 0 : index
    %1 = vector.load %arg2[%c0_1, %c0_2] : memref<784x256xf32, #tpu.memory_space<vmem>>, vector<784x256xf32>
    %cst = arith.constant dense<0.000000e+00> : vector<8x256xf32>
    %2 = tpu.matmul %0, %1, %cst {dimension_numbers = #tpu.dot_dimension_numbers<[1], [0], [0], [1], [0, 0, 1, 1], [], []>} : vector<8x784xf32>, vector<784x256xf32>, vector<8x256xf32> -> vector<8x256xf32>
    %cst_3 = arith.constant 0.000000e+00 : f32
    %3 = vector.broadcast %cst_3 : f32 to vector<8x256xf32>
    %4 = arith.maximumf %2, %3 : vector<8x256xf32>
    %c0_4 = arith.constant 0 : index
    %c0_5 = arith.constant 0 : index
    %5 = vector.load %arg3[%c0_4, %c0_5] : memref<256x128xf32, #tpu.memory_space<vmem>>, vector<256x128xf32>
    %cst_6 = arith.constant dense<0.000000e+00> : vector<8x128xf32>
    %6 = tpu.matmul %4, %5, %cst_6 {dimension_numbers = #tpu.dot_dimension_numbers<[1], [0], [0], [1], [0, 0, 1, 1], [], []>} : vector<8x256xf32>, vector<256x128xf32>, vector<8x128xf32> -> vector<8x128xf32>
    %cst_7 = arith.constant 0.000000e+00 : f32
    %7 = vector.broadcast %cst_7 : f32 to vector<8x128xf32>
    %8 = arith.maximumf %6, %7 : vector<8x128xf32>
    %c0_8 = arith.constant 0 : index
    %c0_9 = arith.constant 0 : index
    %9 = vector.load %arg4[%c0_8, %c0_9] : memref<128x128xf32, #tpu.memory_space<vmem>>, vector<128x128xf32>
    %cst_10 = arith.constant dense<0.000000e+00> : vector<8x128xf32>
    %10 = tpu.matmul %8, %9, %cst_10 {dimension_numbers = #tpu.dot_dimension_numbers<[1], [0], [0], [1], [0, 0, 1, 1], [], []>} : vector<8x128xf32>, vector<128x128xf32>, vector<8x128xf32> -> vector<8x128xf32>
    %11 = tpu.iota {dimensions = array<i32: 1>} : vector<8x128xi32>
    %c10_i32 = arith.constant 10 : i32
    %12 = vector.broadcast %c10_i32 : i32 to vector<8x128xi32>
    %13 = arith.cmpi slt, %11, %12 : vector<8x128xi32>
    %cst_11 = arith.constant -1.000000e+30 : f32
    %14 = vector.broadcast %cst_11 : f32 to vector<8x128xf32>
    %15 = arith.select %13, %10, %14 : vector<8x128xi1>, vector<8x128xf32>
    %cst_12 = arith.constant dense<0xFF800000> : vector<8xf32>
    %16 = vector.multi_reduction <maximumf>, %15, %cst_12 [1] : vector<8x128xf32> to vector<8xf32>
    %17 = vector.shape_cast %16 : vector<8xf32> to vector<8x1xf32>
    %18 = vector.broadcast %17 : vector<8x1xf32> to vector<8x128xf32>
    %19 = arith.subf %15, %18 : vector<8x128xf32>
    %20 = math.exp %19 : vector<8x128xf32>
    %cst_13 = arith.constant dense<0.000000e+00> : vector<8xf32>
    %21 = vector.multi_reduction <add>, %20, %cst_13 [1] : vector<8x128xf32> to vector<8xf32>
    %22 = vector.shape_cast %21 : vector<8xf32> to vector<8x1xf32>
    %23 = math.log %22 : vector<8x1xf32>
    %24 = vector.broadcast %23 : vector<8x1xf32> to vector<8x128xf32>
    %25 = arith.subf %19, %24 : vector<8x128xf32>
    %c0_14 = arith.constant 0 : index
    %c0_15 = arith.constant 0 : index
    %26 = vector.load %arg5[%c0_14, %c0_15] : memref<8x128xf32, #tpu.memory_space<vmem>>, vector<8x128xf32>
    tpu.vector_store %arg5[%c0_14, %c0_15], %25 {strides = array<i32>} : memref<8x128xf32, #tpu.memory_space<vmem>>, vector<8x128xf32>,
    return
  }
  func.func @transform_0(%arg0: i32) -> (i32, i32) {
    %c0_i32 = arith.constant 0 : i32
    %c0_i32_0 = arith.constant 0 : i32
    return %arg0, %c0_i32 : i32, i32
  }
  func.func @transform_1(%arg0: i32) -> (i32, i32) {
    %c0_i32 = arith.constant 0 : i32
    %c0_i32_0 = arith.constant 0 : i32
    %c0_i32_1 = arith.constant 0 : i32
    return %c0_i32, %c0_i32_0 : i32, i32
  }
  func.func @transform_2(%arg0: i32) -> (i32, i32) {
    %c0_i32 = arith.constant 0 : i32
    %c0_i32_0 = arith.constant 0 : i32
    %c0_i32_1 = arith.constant 0 : i32
    return %c0_i32, %c0_i32_0 : i32, i32
  }
  func.func @transform_3(%arg0: i32) -> (i32, i32) {
    %c0_i32 = arith.constant 0 : i32
    %c0_i32_0 = arith.constant 0 : i32
    %c0_i32_1 = arith.constant 0 : i32
    return %c0_i32, %c0_i32_0 : i32, i32
  }
  func.func @transform_4(%arg0: i32) -> (i32, i32) {
    %c0_i32 = arith.constant 0 : i32
    %c0_i32_0 = arith.constant 0 : i32
    return %arg0, %c0_i32 : i32, i32
  }
}

</mosaic_0001>

<llo_original>
// kernel: net_forward.1
$region0: #{net_forward.1}
  #allocation0 [shape = 'u32[]', space=smem, size = 0x4, offset = 0x4, fixed_abs, tag = 'smem constant byte address 0x4 - core index']
  #allocation1 [shape = 'u32[72,128]{1,0:T(1,128)}', space=vmem, size = 0x9000, scoped, tag = 'internal scratch']
  %s0 = inlined_call_operand.hbm [shape: f32[8,784], index: 0, kind: input, shape index: {}]
  %s1 = inlined_call_operand.hbm [shape: f32[784,256], index: 1, kind: input, shape index: {}]
  %s2 = inlined_call_operand.hbm [shape: f32[256,128], index: 2, kind: input, shape index: {}]
  %s3 = inlined_call_operand.hbm [shape: f32[128,128], index: 3, kind: input, shape index: {}]
  %s4 = inlined_call_operand.hbm [shape: f32[8,128], index: 4, kind: output, shape index: {}]
  %s5 = sld [smem:[#allocation0]]
  $region42: #{net_forward.1} parent=0
    _
  %s7 = ssub.s32 1, %s5
  %s8 = scalar_select 0, %s7, %s5
  $region1: #{net_forward.1} parent=0
    #allocation2 [shape = 'u8[28672]{0}', space=vmem, size = 0x7000, scoped, tag = 'input window, operand 0, single buffered']
    #allocation3 [shape = 's32[1]{0}', space=sflag, size = 0x4, scoped, tag = 'scoped memory for net_forward.1']
    #allocation4 [shape = 's32[1]{0}', space=sflag, size = 0x4, scoped, tag = 'scoped memory for net_forward.1']
    #allocation5 [shape = 'u8[802816]{0}', space=vmem, size = 0xc4000, scoped, tag = 'input window, operand 1, single buffered']
    #allocation6 [shape = 's32[1]{0}', space=sflag, size = 0x4, scoped, tag = 'scoped memory for net_forward.1']
    #allocation7 [shape = 'u8[131072]{0}', space=vmem, size = 0x20000, scoped, tag = 'input window, operand 2, single buffered']
    #allocation8 [shape = 'u8[65536]{0}', space=vmem, size = 0x10000, scoped, tag = 'input window, operand 3, single buffered']
    #allocation9 [shape = 's32[1]{0}', space=sflag, size = 0x4, scoped, tag = 'scoped memory for net_forward.1']
    #allocation10 [shape = 'u8[4096]{0}', space=vmem, size = 0x1000, scoped, tag = 'output window, operand 0, single buffered']
    %9 = vsyncpa [#allocation3], 0
    %10 = vsyncpa [#allocation6], 0
    %11 = vsyncpa [#allocation9], 0
    %12 = vsyncpa [#allocation4], 0
    // Predicated region
    $region2: #{net_forward.1} parent=1 // pred_check
      _
    $region3: #{net_forward.1} parent=1 // pred_check_branch
      %14 = sbr.rel (0) target = $region5
    $region4: #{net_forward.1} parent=1 // pred_region
      %16 = vsyncadd [#allocation3], 0
      %s18 = sshll.u32 %s0, 4
      %s19 = int_to_ptr.hbm [resolvable:$true] %s18
      %s20 = sshll.u32 [#allocation2], 4
      %s21 = int_to_ptr.vmem [resolvable:$true] %s20
      %23 = dma.hbm_to_vmem [thread:$0]  %s19, 896, %s21, [#allocation3]
    $region5: #{net_forward.1} parent=1 // pred_fallthru
      _
    // Predicated region
    $region6: #{net_forward.1} parent=1 // pred_check
      _
    $region7: #{net_forward.1} parent=1 // pred_check_branch
      %25 = sbr.rel (0) target = $region9
    $region8: #{net_forward.1} parent=1 // pred_region
      %27 = vsyncadd [#allocation6], 0
      %s28 = sshll.u32 %s1, 4
      %s29 = int_to_ptr.hbm [resolvable:$true] %s28
      %s30 = sshll.u32 [#allocation5], 4
      %s31 = int_to_ptr.vmem [resolvable:$true] %s30
      %36 = dma.hbm_to_vmem [thread:$0]  %s29, 25088, %s31, [#allocation6], 256, 256, 16
    $region9: #{net_forward.1} parent=1 // pred_fallthru
      _
    // Predicated region
    $region10: #{net_forward.1} parent=1 // pred_check
      _
    $region11: #{net_forward.1} parent=1 // pred_check_branch
      %38 = sbr.rel (0) target = $region13
    $region12: #{net_forward.1} parent=1 // pred_region
      %40 = vsyncadd [#allocation6], 0
      %s41 = sshll.u32 %s2, 4
      %s42 = int_to_ptr.hbm [resolvable:$true] %s41
      %s43 = sshll.u32 [#allocation7], 4
      %s44 = int_to_ptr.vmem [resolvable:$true] %s43
      %49 = dma.hbm_to_vmem [thread:$0]  %s42, 4096, %s44, [#allocation6], 128, 128, 8
    $region13: #{net_forward.1} parent=1 // pred_fallthru
      _
    // Predicated region
    $region14: #{net_forward.1} parent=1 // pred_check
      _
    $region15: #{net_forward.1} parent=1 // pred_check_branch
      %51 = sbr.rel (0) target = $region17
    $region16: #{net_forward.1} parent=1 // pred_region
      %53 = vsyncadd [#allocation9], 0
      %s54 = sshll.u32 %s3, 4
      %s55 = int_to_ptr.hbm [resolvable:$true] %s54
      %s56 = sshll.u32 [#allocation8], 4
      %s57 = int_to_ptr.vmem [resolvable:$true] %s56
      %62 = dma.hbm_to_vmem [thread:$0]  %s55, 2048, %s57, [#allocation9], 128, 128, 8
    $region17: #{net_forward.1} parent=1 // pred_fallthru
      _
    // Predicated region
    $region18: #{net_forward.1} parent=1 // pred_check
      _
    $region19: #{net_forward.1} parent=1 // pred_check_branch
      %64 = sbr.rel (0) target = $region21
    $region20: #{net_forward.1} parent=1 // pred_region
      %66 = dma.done [#allocation3], 896
    $region21: #{net_forward.1} parent=1 // pred_fallthru
      _
    // Predicated region
    $region22: #{net_forward.1} parent=1 // pred_check
      _
    $region23: #{net_forward.1} parent=1 // pred_check_branch
      %68 = sbr.rel (0) target = $region25
    $region24: #{net_forward.1} parent=1 // pred_region
      %70 = dma.done [#allocation6], 25088
    $region25: #{net_forward.1} parent=1 // pred_fallthru
      _
    // Predicated region
    $region26: #{net_forward.1} parent=1 // pred_check
      _
    $region27: #{net_forward.1} parent=1 // pred_check_branch
      %72 = sbr.rel (0) target = $region29
    $region28: #{net_forward.1} parent=1 // pred_region
      %74 = dma.done [#allocation6], 4096
    $region29: #{net_forward.1} parent=1 // pred_fallthru
      _
    // Predicated region
    $region30: #{net_forward.1} parent=1 // pred_check
      _
    $region31: #{net_forward.1} parent=1 // pred_check_branch
      %76 = sbr.rel (0) target = $region33
    $region32: #{net_forward.1} parent=1 // pred_region
      %78 = dma.done [#allocation9], 2048
    $region33: #{net_forward.1} parent=1 // pred_fallthru
      _
    %v79 = vld [vmem:[#allocation2] sm:$0xff]
    %v80 = vld [vmem:[#allocation2 + $0x8] sm:$0xff]
    %v81 = vld [vmem:[#allocation2 + $0x10] sm:$0xff]
    %v82 = vld [vmem:[#allocation2 + $0x18] sm:$0xff]
    %v83 = vld [vmem:[#allocation2 + $0x20] sm:$0xff]
    %v84 = vld [vmem:[#allocation2 + $0x28] sm:$0xff]
    %v85 = vld [vmem:[#allocation2 + $0x30] sm:$0xff]
    %v86 = vld [vmem:[#allocation5] sm:$0xff]
    %v87 = vld [vmem:[#allocation5 + $0x8] sm:$0xff]
    %v88 = vld [vmem:[#allocation5 + $0x10] sm:$0xff]
    %v89 = vld [vmem:[#allocation5 + $0x18] sm:$0xff]
    %v90 = vld [vmem:[#allocation5 + $0x20] sm:$0xff]
    %v91 = vld [vmem:[#allocation5 + $0x28] sm:$0xff]
    %v92 = vld [vmem:[#allocation5 + $0x30] sm:$0xff]
    %v93 = vld [vmem:[#allocation5 + $0x38] sm:$0xff]
    %v94 = vld [vmem:[#allocation5 + $0x40] sm:$0xff]
    %v95 = vld [vmem:[#allocation5 + $0x48] sm:$0xff]
    %v96 = vld [vmem:[#allocation5 + $0x50] sm:$0xff]
    %v97 = vld [vmem:[#allocation5 + $0x58] sm:$0xff]
    %v98 = vld [vmem:[#allocation5 + $0x60] sm:$0xff]
    %v99 = vld [vmem:[#allocation5 + $0x68] sm:$0xff]
    %v100 = vld [vmem:[#allocation5 + $0x70] sm:$0xff]
    %v101 = vld [vmem:[#allocation5 + $0x78] sm:$0xff]
    %v102 = vld [vmem:[#allocation5 + $0x80] sm:$0xff]
    %v103 = vld [vmem:[#allocation5 + $0x88] sm:$0xff]
    %v104 = vld [vmem:[#allocation5 + $0x90] sm:$0xff]
    %v105 = vld [vmem:[#allocation5 + $0x98] sm:$0xff]
    %v106 = vld [vmem:[#allocation5 + $0xa0] sm:$0xff]
    %v107 = vld [vmem:[#allocation5 + $0xa8] sm:$0xff]
    %v108 = vld [vmem:[#allocation5 + $0xb0] sm:$0xff]
    %v109 = vld [vmem:[#allocation5 + $0xb8] sm:$0xff]
    %v110 = vld [vmem:[#allocation5 + $0xc0] sm:$0xff]
    %v111 = vld [vmem:[#allocation5 + $0xc8] sm:$0xff]
    %v112 = vld [vmem:[#allocation5 + $0xd0] sm:$0xff]
    %v113 = vld [vmem:[#allocation5 + $0xd8] sm:$0xff]
    %v114 = vld [vmem:[#allocation5 + $0xe0] sm:$0xff]
    %v115 = vld [vmem:[#allocation5 + $0xe8] sm:$0xff]
    %v116 = vld [vmem:[#allocation5 + $0xf0] sm:$0xff]
    %v117 = vld [vmem:[#allocation5 + $0xf8] sm:$0xff]
    %v118 = vld [vmem:[#allocation5 + $0x100] sm:$0xff]
    %v119 = vld [vmem:[#allocation5 + $0x108] sm:$0xff]
    %v120 = vld [vmem:[#allocation5 + $0x110] sm:$0xff]
    %v121 = vld [vmem:[#allocation5 + $0x118] sm:$0xff]
    %v122 = vld [vmem:[#allocation5 + $0x120] sm:$0xff]
    %v123 = vld [vmem:[#allocation5 + $0x128] sm:$0xff]
    %v124 = vld [vmem:[#allocation5 + $0x130] sm:$0xff]
    %v125 = vld [vmem:[#allocation5 + $0x138] sm:$0xff]
    %v126 = vld [vmem:[#allocation5 + $0x140] sm:$0xff]
    %v127 = vld [vmem:[#allocation5 + $0x148] sm:$0xff]
    %v128 = vld [vmem:[#allocation5 + $0x150] sm:$0xff]
    %v129 = vld [vmem:[#allocation5 + $0x158] sm:$0xff]
    %v130 = vld [vmem:[#allocation5 + $0x160] sm:$0xff]
    %v131 = vld [vmem:[#allocation5 + $0x168] sm:$0xff]
    %v132 = vld [vmem:[#allocation5 + $0x170] sm:$0xff]
    %v133 = vld [vmem:[#allocation5 + $0x178] sm:$0xff]
    %v134 = vld [vmem:[#allocation5 + $0x180] sm:$0xff]
    %v135 = vld [vmem:[#allocation5 + $0x188] sm:$0xff]
    %v136 = vld [vmem:[#allocation5 + $0x190] sm:$0xff]
    %v137 = vld [vmem:[#allocation5 + $0x198] sm:$0xff]
    %v138 = vld [vmem:[#allocation5 + $0x1a0] sm:$0xff]
    %v139 = vld [vmem:[#allocation5 + $0x1a8] sm:$0xff]
    %v140 = vld [vmem:[#allocation5 + $0x1b0] sm:$0xff]
    %v141 = vld [vmem:[#allocation5 + $0x1b8] sm:$0xff]
    %v142 = vld [vmem:[#allocation5 + $0x1c0] sm:$0xff]
    %v143 = vld [vmem:[#allocation5 + $0x1c8] sm:$0xff]
    %v144 = vld [vmem:[#allocation5 + $0x1d0] sm:$0xff]
    %v145 = vld [vmem:[#allocation5 + $0x1d8] sm:$0xff]
    %v146 = vld [vmem:[#allocation5 + $0x1e0] sm:$0xff]
    %v147 = vld [vmem:[#allocation5 + $0x1e8] sm:$0xff]
    %v148 = vld [vmem:[#allocation5 + $0x1f0] sm:$0xff]
    %v149 = vld [vmem:[#allocation5 + $0x1f8] sm:$0xff]
    %v150 = vld [vmem:[#allocation5 + $0x200] sm:$0xff]
    %v151 = vld [vmem:[#allocation5 + $0x208] sm:$0xff]
    %v152 = vld [vmem:[#allocation5 + $0x210] sm:$0xff]
    %v153 = vld [vmem:[#allocation5 + $0x218] sm:$0xff]
    %v154 = vld [vmem:[#allocation5 + $0x220] sm:$0xff]
    %v155 = vld [vmem:[#allocation5 + $0x228] sm:$0xff]
    %v156 = vld [vmem:[#allocation5 + $0x230] sm:$0xff]
    %v157 = vld [vmem:[#allocation5 + $0x238] sm:$0xff]
    %v158 = vld [vmem:[#allocation5 + $0x240] sm:$0xff]
    %v159 = vld [vmem:[#allocation5 + $0x248] sm:$0xff]
    %v160 = vld [vmem:[#allocation5 + $0x250] sm:$0xff]
    %v161 = vld [vmem:[#allocation5 + $0x258] sm:$0xff]
    %v162 = vld [vmem:[#allocation5 + $0x260] sm:$0xff]
    %v163 = vld [vmem:[#allocation5 + $0x268] sm:$0xff]
    %v164 = vld [vmem:[#allocation5 + $0x270] sm:$0xff]
    %v165 = vld [vmem:[#allocation5 + $0x278] sm:$0xff]
    %v166 = vld [vmem:[#allocation5 + $0x280] sm:$0xff]
    %v167 = vld [vmem:[#allocation5 + $0x288] sm:$0xff]
    %v168 = vld [vmem:[#allocation5 + $0x290] sm:$0xff]
    %v169 = vld [vmem:[#allocation5 + $0x298] sm:$0xff]
    %v170 = vld [vmem:[#allocation5 + $0x2a0] sm:$0xff]
    %v171 = vld [vmem:[#allocation5 + $0x2a8] sm:$0xff]
    %v172 = vld [vmem:[#allocation5 + $0x2b0] sm:$0xff]
    %v173 = vld [vmem:[#allocation5 + $0x2b8] sm:$0xff]
    %v174 = vld [vmem:[#allocation5 + $0x2c0] sm:$0xff]
    %v175 = vld [vmem:[#allocation5 + $0x2c8] sm:$0xff]
    %v176 = vld [vmem:[#allocation5 + $0x2d0] sm:$0xff]
    %v177 = vld [vmem:[#allocation5 + $0x2d8] sm:$0xff]
    %v178 = vld [vmem:[#allocation5 + $0x2e0] sm:$0xff]
    %v179 = vld [vmem:[#allocation5 + $0x2e8] sm:$0xff]
    %v180 = vld [vmem:[#allocation5 + $0x2f0] sm:$0xff]
    %v181 = vld [vmem:[#allocation5 + $0x2f8] sm:$0xff]
    %v182 = vld [vmem:[#allocation5 + $0x300] sm:$0xff]
    %v183 = vld [vmem:[#allocation5 + $0x308] sm:$0xff]
    %v184 = vld [vmem:[#allocation5 + $0x310] sm:$0xff]
    %v185 = vld [vmem:[#allocation5 + $0x318] sm:$0xff]
    %v186 = vld [vmem:[#allocation5 + $0x320] sm:$0xff]
    %v187 = vld [vmem:[#allocation5 + $0x328] sm:$0xff]
    %v188 = vld [vmem:[#allocation5 + $0x330] sm:$0xff]
    %v189 = vld [vmem:[#allocation5 + $0x338] sm:$0xff]
    %v190 = vld [vmem:[#allocation5 + $0x340] sm:$0xff]
    %v191 = vld [vmem:[#allocation5 + $0x348] sm:$0xff]
    %v192 = vld [vmem:[#allocation5 + $0x350] sm:$0xff]
    %v193 = vld [vmem:[#allocation5 + $0x358] sm:$0xff]
    %v194 = vld [vmem:[#allocation5 + $0x360] sm:$0xff]
    %v195 = vld [vmem:[#allocation5 + $0x368] sm:$0xff]
    %v196 = vld [vmem:[#allocation5 + $0x370] sm:$0xff]
    %v197 = vld [vmem:[#allocation5 + $0x378] sm:$0xff]
    %v198 = vld [vmem:[#allocation5 + $0x380] sm:$0xff]
    %v199 = vld [vmem:[#allocation5 + $0x388] sm:$0xff]
    %v200 = vld [vmem:[#allocation5 + $0x390] sm:$0xff]
    %v201 = vld [vmem:[#allocation5 + $0x398] sm:$0xff]
    %v202 = vld [vmem:[#allocation5 + $0x3a0] sm:$0xff]
    %v203 = vld [vmem:[#allocation5 + $0x3a8] sm:$0xff]
    %v204 = vld [vmem:[#allocation5 + $0x3b0] sm:$0xff]
    %v205 = vld [vmem:[#allocation5 + $0x3b8] sm:$0xff]
    %v206 = vld [vmem:[#allocation5 + $0x3c0] sm:$0xff]
    %v207 = vld [vmem:[#allocation5 + $0x3c8] sm:$0xff]
    %v208 = vld [vmem:[#allocation5 + $0x3d0] sm:$0xff]
    %v209 = vld [vmem:[#allocation5 + $0x3d8] sm:$0xff]
    %v210 = vld [vmem:[#allocation5 + $0x3e0] sm:$0xff]
    %v211 = vld [vmem:[#allocation5 + $0x3e8] sm:$0xff]
    %v212 = vld [vmem:[#allocation5 + $0x3f0] sm:$0xff]
    %v213 = vld [vmem:[#allocation5 + $0x3f8] sm:$0xff]
    %v214 = vld [vmem:[#allocation5 + $0x400] sm:$0xff]
    %v215 = vld [vmem:[#allocation5 + $0x408] sm:$0xff]
    %v216 = vld [vmem:[#allocation5 + $0x410] sm:$0xff]
    %v217 = vld [vmem:[#allocation5 + $0x418] sm:$0xff]
    %v218 = vld [vmem:[#allocation5 + $0x420] sm:$0xff]
    %v219 = vld [vmem:[#allocation5 + $0x428] sm:$0xff]
    %v220 = vld [vmem:[#allocation5 + $0x430] sm:$0xff]
    %v221 = vld [vmem:[#allocation5 + $0x438] sm:$0xff]
    %v222 = vld [vmem:[#allocation5 + $0x440] sm:$0xff]
    %v223 = vld [vmem:[#allocation5 + $0x448] sm:$0xff]
    %v224 = vld [vmem:[#allocation5 + $0x450] sm:$0xff]
    %v225 = vld [vmem:[#allocation5 + $0x458] sm:$0xff]
    %v226 = vld [vmem:[#allocation5 + $0x460] sm:$0xff]
    %v227 = vld [vmem:[#allocation5 + $0x468] sm:$0xff]
    %v228 = vld [vmem:[#allocation5 + $0x470] sm:$0xff]
    %v229 = vld [vmem:[#allocation5 + $0x478] sm:$0xff]
    %v230 = vld [vmem:[#allocation5 + $0x480] sm:$0xff]
    %v231 = vld [vmem:[#allocation5 + $0x488] sm:$0xff]
    %v232 = vld [vmem:[#allocation5 + $0x490] sm:$0xff]
    %v233 = vld [vmem:[#allocation5 + $0x498] sm:$0xff]
    %v234 = vld [vmem:[#allocation5 + $0x4a0] sm:$0xff]
    %v235 = vld [vmem:[#allocation5 + $0x4a8] sm:$0xff]
    %v236 = vld [vmem:[#allocation5 + $0x4b0] sm:$0xff]
    %v237 = vld [vmem:[#allocation5 + $0x4b8] sm:$0xff]
    %v238 = vld [vmem:[#allocation5 + $0x4c0] sm:$0xff]
    %v239 = vld [vmem:[#allocation5 + $0x4c8] sm:$0xff]
    %v240 = vld [vmem:[#allocation5 + $0x4d0] sm:$0xff]
    %v241 = vld [vmem:[#allocation5 + $0x4d8] sm:$0xff]
    %v242 = vld [vmem:[#allocation5 + $0x4e0] sm:$0xff]
    %v243 = vld [vmem:[#allocation5 + $0x4e8] sm:$0xff]
    %v244 = vld [vmem:[#allocation5 + $0x4f0] sm:$0xff]
    %v245 = vld [vmem:[#allocation5 + $0x4f8] sm:$0xff]
    %v246 = vld [vmem:[#allocation5 + $0x500] sm:$0xff]
    %v247 = vld [vmem:[#allocation5 + $0x508] sm:$0xff]
    %v248 = vld [vmem:[#allocation5 + $0x510] sm:$0xff]
    %v249 = vld [vmem:[#allocation5 + $0x518] sm:$0xff]
    %v250 = vld [vmem:[#allocation5 + $0x520] sm:$0xff]
    %v251 = vld [vmem:[#allocation5 + $0x528] sm:$0xff]
    %v252 = vld [vmem:[#allocation5 + $0x530] sm:$0xff]
    %v253 = vld [vmem:[#allocation5 + $0x538] sm:$0xff]
    %v254 = vld [vmem:[#allocation5 + $0x540] sm:$0xff]
    %v255 = vld [vmem:[#allocation5 + $0x548] sm:$0xff]
    %v256 = vld [vmem:[#allocation5 + $0x550] sm:$0xff]
    %v257 = vld [vmem:[#allocation5 + $0x558] sm:$0xff]
    %v258 = vld [vmem:[#allocation5 + $0x560] sm:$0xff]
    %v259 = vld [vmem:[#allocation5 + $0x568] sm:$0xff]
    %v260 = vld [vmem:[#allocation5 + $0x570] sm:$0xff]
    %v261 = vld [vmem:[#allocation5 + $0x578] sm:$0xff]
    %v262 = vld [vmem:[#allocation5 + $0x580] sm:$0xff]
    %v263 = vld [vmem:[#allocation5 + $0x588] sm:$0xff]
    %v264 = vld [vmem:[#allocation5 + $0x590] sm:$0xff]
    %v265 = vld [vmem:[#allocation5 + $0x598] sm:$0xff]
    %v266 = vld [vmem:[#allocation5 + $0x5a0] sm:$0xff]
    %v267 = vld [vmem:[#allocation5 + $0x5a8] sm:$0xff]
    %v268 = vld [vmem:[#allocation5 + $0x5b0] sm:$0xff]
    %v269 = vld [vmem:[#allocation5 + $0x5b8] sm:$0xff]
    %v270 = vld [vmem:[#allocation5 + $0x5c0] sm:$0xff]
    %v271 = vld [vmem:[#allocation5 + $0x5c8] sm:$0xff]
    %v272 = vld [vmem:[#allocation5 + $0x5d0] sm:$0xff]
    %v273 = vld [vmem:[#allocation5 + $0x5d8] sm:$0xff]
    %v274 = vld [vmem:[#allocation5 + $0x5e0] sm:$0xff]
    %v275 = vld [vmem:[#allocation5 + $0x5e8] sm:$0xff]
    %v276 = vld [vmem:[#allocation5 + $0x5f0] sm:$0xff]
    %v277 = vld [vmem:[#allocation5 + $0x5f8] sm:$0xff]
    %v278 = vld [vmem:[#allocation5 + $0x600] sm:$0xff]
    %v279 = vld [vmem:[#allocation5 + $0x608] sm:$0xff]
    %v280 = vld [vmem:[#allocation5 + $0x610] sm:$0xff]
    %v281 = vld [vmem:[#allocation5 + $0x618] sm:$0xff]
    %vm282 = vcmask 130048
    %v284 = vsel %vm282, %v85, 0
    %286 = vmatpush.msra.mxu0 %v116
    %287 = vmatpush.msra.mxu0 %v114
    %288 = vmatpush.msra.mxu0 %v112
    %289 = vmatpush.msra.mxu0 %v110
    %290 = vmatpush.msra.mxu0 %v108
    %291 = vmatpush.msra.mxu0 %v106
    %292 = vmatpush.msra.mxu0 %v104
    %293 = vmatpush.msra.mxu0 %v102
    %294 = vmatpush.msra.mxu0 %v100
    %295 = vmatpush.msra.mxu0 %v98
    %296 = vmatpush.msra.mxu0 %v96
    %297 = vmatpush.msra.mxu0 %v94
    %298 = vmatpush.msra.mxu0 %v92
    %299 = vmatpush.msra.mxu0 %v90
    %300 = vmatpush.msra.mxu0 %v88
    %301 = vmatpush.msra.mxu0 %v86
    %302 = vmatmul.f32.gmra.mxu0 %v79
    %v303 = vpop.f32.mrf.mxu0
    %v304 = vadd.f32 0.0, %v303
    %305 = vdwg.mxu0
    %306 = vmatpush.msra.mxu0 %v148
    %307 = vmatpush.msra.mxu0 %v146
    %308 = vmatpush.msra.mxu0 %v144
    %309 = vmatpush.msra.mxu0 %v142
    %310 = vmatpush.msra.mxu0 %v140
    %311 = vmatpush.msra.mxu0 %v138
    %312 = vmatpush.msra.mxu0 %v136
    %313 = vmatpush.msra.mxu0 %v134
    %314 = vmatpush.msra.mxu0 %v132
    %315 = vmatpush.msra.mxu0 %v130
    %316 = vmatpush.msra.mxu0 %v128
    %317 = vmatpush.msra.mxu0 %v126
    %318 = vmatpush.msra.mxu0 %v124
    %319 = vmatpush.msra.mxu0 %v122
    %320 = vmatpush.msra.mxu0 %v120
    %321 = vmatpush.msra.mxu0 %v118
    %322 = vmatmul.f32.gmra.mxu0 %v80
    %v323 = vpop.f32.mrf.mxu0
    %v324 = vadd.f32 %v304, %v323
    %325 = vdwg.mxu0
    %326 = vmatpush.msra.mxu0 %v180
    %327 = vmatpush.msra.mxu0 %v178
    %328 = vmatpush.msra.mxu0 %v176
    %329 = vmatpush.msra.mxu0 %v174
    %330 = vmatpush.msra.mxu0 %v172
    %331 = vmatpush.msra.mxu0 %v170
    %332 = vmatpush.msra.mxu0 %v168
    %333 = vmatpush.msra.mxu0 %v166
    %334 = vmatpush.msra.mxu0 %v164
    %335 = vmatpush.msra.mxu0 %v162
    %336 = vmatpush.msra.mxu0 %v160
    %337 = vmatpush.msra.mxu0 %v158
    %338 = vmatpush.msra.mxu0 %v156
    %339 = vmatpush.msra.mxu0 %v154
    %340 = vmatpush.msra.mxu0 %v152
    %341 = vmatpush.msra.mxu0 %v150
    %342 = vmatmul.f32.gmra.mxu0 %v81
    %v343 = vpop.f32.mrf.mxu0
    %v344 = vadd.f32 %v324, %v343
    %345 = vdwg.mxu0
    %346 = vmatpush.msra.mxu0 %v212
    %347 = vmatpush.msra.mxu0 %v210
    %348 = vmatpush.msra.mxu0 %v208
    %349 = vmatpush.msra.mxu0 %v206
    %350 = vmatpush.msra.mxu0 %v204
    %351 = vmatpush.msra.mxu0 %v202
    %352 = vmatpush.msra.mxu0 %v200
    %353 = vmatpush.msra.mxu0 %v198
    %354 = vmatpush.msra.mxu0 %v196
    %355 = vmatpush.msra.mxu0 %v194
    %356 = vmatpush.msra.mxu0 %v192
    %357 = vmatpush.msra.mxu0 %v190
    %358 = vmatpush.msra.mxu0 %v188
    %359 = vmatpush.msra.mxu0 %v186
    %360 = vmatpush.msra.mxu0 %v184
    %361 = vmatpush.msra.mxu0 %v182
    %362 = vmatmul.f32.gmra.mxu0 %v82
    %v363 = vpop.f32.mrf.mxu0
    %v364 = vadd.f32 %v344, %v363
    %365 = vdwg.mxu0
    %366 = vmatpush.msra.mxu0 %v244
    %367 = vmatpush.msra.mxu0 %v242
    %368 = vmatpush.msra.mxu0 %v240
    %369 = vmatpush.msra.mxu0 %v238
    %370 = vmatpush.msra.mxu0 %v236
    %371 = vmatpush.msra.mxu0 %v234
    %372 = vmatpush.msra.mxu0 %v232
    %373 = vmatpush.msra.mxu0 %v230
    %374 = vmatpush.msra.mxu0 %v228
    %375 = vmatpush.msra.mxu0 %v226
    %376 = vmatpush.msra.mxu0 %v224
    %377 = vmatpush.msra.mxu0 %v222
    %378 = vmatpush.msra.mxu0 %v220
    %379 = vmatpush.msra.mxu0 %v218
    %380 = vmatpush.msra.mxu0 %v216
    %381 = vmatpush.msra.mxu0 %v214
    %382 = vmatmul.f32.gmra.mxu0 %v83
    %v383 = vpop.f32.mrf.mxu0
    %v384 = vadd.f32 %v364, %v383
    %385 = vdwg.mxu0
    %386 = vmatpush.msra.mxu0 %v276
    %387 = vmatpush.msra.mxu0 %v274
    %388 = vmatpush.msra.mxu0 %v272
    %389 = vmatpush.msra.mxu0 %v270
    %390 = vmatpush.msra.mxu0 %v268
    %391 = vmatpush.msra.mxu0 %v266
    %392 = vmatpush.msra.mxu0 %v264
    %393 = vmatpush.msra.mxu0 %v262
    %394 = vmatpush.msra.mxu0 %v260
    %395 = vmatpush.msra.mxu0 %v258
    %396 = vmatpush.msra.mxu0 %v256
    %397 = vmatpush.msra.mxu0 %v254
    %398 = vmatpush.msra.mxu0 %v252
    %399 = vmatpush.msra.mxu0 %v250
    %400 = vmatpush.msra.mxu0 %v248
    %401 = vmatpush.msra.mxu0 %v246
    %402 = vmatmul.f32.gmra.mxu0 %v84
    %v403 = vpop.f32.mrf.mxu0
    %v404 = vadd.f32 %v384, %v403
    %405 = vdwg.mxu0
    %406 = vmatpush.msra.mxu0 0.0
    %407 = vmatpush.msra.mxu0 0.0
    %408 = vmatpush.msra.mxu0 0.0
    %409 = vmatpush.msra.mxu0 0.0
    %410 = vmatpush.msra.mxu0 0.0
    %411 = vmatpush.msra.mxu0 0.0
    %412 = vmatpush.msra.mxu0 0.0
    %413 = vmatpush.msra.mxu0 0.0
    %414 = vmatpush.msra.mxu0 0.0
    %415 = vmatpush.msra.mxu0 0.0
    %416 = vmatpush.msra.mxu0 0.0
    %417 = vmatpush.msra.mxu0 0.0
    %418 = vmatpush.msra.mxu0 0.0
    %419 = vmatpush.msra.mxu0 0.0
    %420 = vmatpush.msra.mxu0 %v280
    %421 = vmatpush.msra.mxu0 %v278
    %422 = vmatmul.f32.gmra.mxu0 %v284
    %v423 = vpop.f32.mrf.mxu0
    %v424 = vadd.f32 %v404, %v423
    %425 = vdwg.mxu0
    %426 = vmatpush.msra.mxu0 %v117
    %427 = vmatpush.msra.mxu0 %v115
    %428 = vmatpush.msra.mxu0 %v113
    %429 = vmatpush.msra.mxu0 %v111
    %430 = vmatpush.msra.mxu0 %v109
    %431 = vmatpush.msra.mxu0 %v107
    %432 = vmatpush.msra.mxu0 %v105
    %433 = vmatpush.msra.mxu0 %v103
    %434 = vmatpush.msra.mxu0 %v101
    %435 = vmatpush.msra.mxu0 %v99
    %436 = vmatpush.msra.mxu0 %v97
    %437 = vmatpush.msra.mxu0 %v95
    %438 = vmatpush.msra.mxu0 %v93
    %439 = vmatpush.msra.mxu0 %v91
    %440 = vmatpush.msra.mxu0 %v89
    %441 = vmatpush.msra.mxu0 %v87
    %442 = vmatmul.f32.gmra.mxu0 %v79
    %v443 = vpop.f32.mrf.mxu0
    %v444 = vadd.f32 0.0, %v443
    %445 = vdwg.mxu0
    %446 = vmatpush.msra.mxu0 %v149
    %447 = vmatpush.msra.mxu0 %v147
    %448 = vmatpush.msra.mxu0 %v145
    %449 = vmatpush.msra.mxu0 %v143
    %450 = vmatpush.msra.mxu0 %v141
    %451 = vmatpush.msra.mxu0 %v139
    %452 = vmatpush.msra.mxu0 %v137
    %453 = vmatpush.msra.mxu0 %v135
    %454 = vmatpush.msra.mxu0 %v133
    %455 = vmatpush.msra.mxu0 %v131
    %456 = vmatpush.msra.mxu0 %v129
    %457 = vmatpush.msra.mxu0 %v127
    %458 = vmatpush.msra.mxu0 %v125
    %459 = vmatpush.msra.mxu0 %v123
    %460 = vmatpush.msra.mxu0 %v121
    %461 = vmatpush.msra.mxu0 %v119
    %462 = vmatmul.f32.gmra.mxu0 %v80
    %v463 = vpop.f32.mrf.mxu0
    %v464 = vadd.f32 %v444, %v463
    %465 = vdwg.mxu0
    %466 = vmatpush.msra.mxu0 %v181
    %467 = vmatpush.msra.mxu0 %v179
    %468 = vmatpush.msra.mxu0 %v177
    %469 = vmatpush.msra.mxu0 %v175
    %470 = vmatpush.msra.mxu0 %v173
    %471 = vmatpush.msra.mxu0 %v171
    %472 = vmatpush.msra.mxu0 %v169
    %473 = vmatpush.msra.mxu0 %v167
    %474 = vmatpush.msra.mxu0 %v165
    %475 = vmatpush.msra.mxu0 %v163
    %476 = vmatpush.msra.mxu0 %v161
    %477 = vmatpush.msra.mxu0 %v159
    %478 = vmatpush.msra.mxu0 %v157
    %479 = vmatpush.msra.mxu0 %v155
    %480 = vmatpush.msra.mxu0 %v153
    %481 = vmatpush.msra.mxu0 %v151
    %482 = vmatmul.f32.gmra.mxu0 %v81
    %v483 = vpop.f32.mrf.mxu0
    %v484 = vadd.f32 %v464, %v483
    %485 = vdwg.mxu0
    %486 = vmatpush.msra.mxu0 %v213
    %487 = vmatpush.msra.mxu0 %v211
    %488 = vmatpush.msra.mxu0 %v209
    %489 = vmatpush.msra.mxu0 %v207
    %490 = vmatpush.msra.mxu0 %v205
    %491 = vmatpush.msra.mxu0 %v203
    %492 = vmatpush.msra.mxu0 %v201
    %493 = vmatpush.msra.mxu0 %v199
    %494 = vmatpush.msra.mxu0 %v197
    %495 = vmatpush.msra.mxu0 %v195
    %496 = vmatpush.msra.mxu0 %v193
    %497 = vmatpush.msra.mxu0 %v191
    %498 = vmatpush.msra.mxu0 %v189
    %499 = vmatpush.msra.mxu0 %v187
    %500 = vmatpush.msra.mxu0 %v185
    %501 = vmatpush.msra.mxu0 %v183
    %502 = vmatmul.f32.gmra.mxu0 %v82
    %v503 = vpop.f32.mrf.mxu0
    %v504 = vadd.f32 %v484, %v503
    %505 = vdwg.mxu0
    %506 = vmatpush.msra.mxu0 %v245
    %507 = vmatpush.msra.mxu0 %v243
    %508 = vmatpush.msra.mxu0 %v241
    %509 = vmatpush.msra.mxu0 %v239
    %510 = vmatpush.msra.mxu0 %v237
    %511 = vmatpush.msra.mxu0 %v235
    %512 = vmatpush.msra.mxu0 %v233
    %513 = vmatpush.msra.mxu0 %v231
    %514 = vmatpush.msra.mxu0 %v229
    %515 = vmatpush.msra.mxu0 %v227
    %516 = vmatpush.msra.mxu0 %v225
    %517 = vmatpush.msra.mxu0 %v223
    %518 = vmatpush.msra.mxu0 %v221
    %519 = vmatpush.msra.mxu0 %v219
    %520 = vmatpush.msra.mxu0 %v217
    %521 = vmatpush.msra.mxu0 %v215
    %522 = vmatmul.f32.gmra.mxu0 %v83
    %v523 = vpop.f32.mrf.mxu0
    %v524 = vadd.f32 %v504, %v523
    %525 = vdwg.mxu0
    %526 = vmatpush.msra.mxu0 %v277
    %527 = vmatpush.msra.mxu0 %v275
    %528 = vmatpush.msra.mxu0 %v273
    %529 = vmatpush.msra.mxu0 %v271
    %530 = vmatpush.msra.mxu0 %v269
    %531 = vmatpush.msra.mxu0 %v267
    %532 = vmatpush.msra.mxu0 %v265
    %533 = vmatpush.msra.mxu0 %v263
    %534 = vmatpush.msra.mxu0 %v261
    %535 = vmatpush.msra.mxu0 %v259
    %536 = vmatpush.msra.mxu0 %v257
    %537 = vmatpush.msra.mxu0 %v255
    %538 = vmatpush.msra.mxu0 %v253
    %539 = vmatpush.msra.mxu0 %v251
    %540 = vmatpush.msra.mxu0 %v249
    %541 = vmatpush.msra.mxu0 %v247
    %542 = vmatmul.f32.gmra.mxu0 %v84
    %v543 = vpop.f32.mrf.mxu0
    %v544 = vadd.f32 %v524, %v543
    %545 = vdwg.mxu0
    %546 = vmatpush.msra.mxu0 0.0
    %547 = vmatpush.msra.mxu0 0.0
    %548 = vmatpush.msra.mxu0 0.0
    %549 = vmatpush.msra.mxu0 0.0
    %550 = vmatpush.msra.mxu0 0.0
    %551 = vmatpush.msra.mxu0 0.0
    %552 = vmatpush.msra.mxu0 0.0
    %553 = vmatpush.msra.mxu0 0.0
    %554 = vmatpush.msra.mxu0 0.0
    %555 = vmatpush.msra.mxu0 0.0
    %556 = vmatpush.msra.mxu0 0.0
    %557 = vmatpush.msra.mxu0 0.0
    %558 = vmatpush.msra.mxu0 0.0
    %559 = vmatpush.msra.mxu0 0.0
    %560 = vmatpush.msra.mxu0 %v281
    %561 = vmatpush.msra.mxu0 %v279
    %562 = vmatmul.f32.gmra.mxu0 %v284
    %v563 = vpop.f32.mrf.mxu0
    %v564 = vadd.f32 %v544, %v563
    %565 = vdwg.mxu0
    %v566 = vmax.f32 %v424, 0.0
    %v567 = vmax.f32 %v564, 0.0
    %v568 = vld [vmem:[#allocation7] sm:$0xff]
    %v569 = vld [vmem:[#allocation7 + $0x8] sm:$0xff]
    %v570 = vld [vmem:[#allocation7 + $0x10] sm:$0xff]
    %v571 = vld [vmem:[#allocation7 + $0x18] sm:$0xff]
    %v572 = vld [vmem:[#allocation7 + $0x20] sm:$0xff]
    %v573 = vld [vmem:[#allocation7 + $0x28] sm:$0xff]
    %v574 = vld [vmem:[#allocation7 + $0x30] sm:$0xff]
    %v575 = vld [vmem:[#allocation7 + $0x38] sm:$0xff]
    %v576 = vld [vmem:[#allocation7 + $0x40] sm:$0xff]
    %v577 = vld [vmem:[#allocation7 + $0x48] sm:$0xff]
    %v578 = vld [vmem:[#allocation7 + $0x50] sm:$0xff]
    %v579 = vld [vmem:[#allocation7 + $0x58] sm:$0xff]
    %v580 = vld [vmem:[#allocation7 + $0x60] sm:$0xff]
    %v581 = vld [vmem:[#allocation7 + $0x68] sm:$0xff]
    %v582 = vld [vmem:[#allocation7 + $0x70] sm:$0xff]
    %v583 = vld [vmem:[#allocation7 + $0x78] sm:$0xff]
    %v584 = vld [vmem:[#allocation7 + $0x80] sm:$0xff]
    %v585 = vld [vmem:[#allocation7 + $0x88] sm:$0xff]
    %v586 = vld [vmem:[#allocation7 + $0x90] sm:$0xff]
    %v587 = vld [vmem:[#allocation7 + $0x98] sm:$0xff]
    %v588 = vld [vmem:[#allocation7 + $0xa0] sm:$0xff]
    %v589 = vld [vmem:[#allocation7 + $0xa8] sm:$0xff]
    %v590 = vld [vmem:[#allocation7 + $0xb0] sm:$0xff]
    %v591 = vld [vmem:[#allocation7 + $0xb8] sm:$0xff]
    %v592 = vld [vmem:[#allocation7 + $0xc0] sm:$0xff]
    %v593 = vld [vmem:[#allocation7 + $0xc8] sm:$0xff]
    %v594 = vld [vmem:[#allocation7 + $0xd0] sm:$0xff]
    %v595 = vld [vmem:[#allocation7 + $0xd8] sm:$0xff]
    %v596 = vld [vmem:[#allocation7 + $0xe0] sm:$0xff]
    %v597 = vld [vmem:[#allocation7 + $0xe8] sm:$0xff]
    %v598 = vld [vmem:[#allocation7 + $0xf0] sm:$0xff]
    %v599 = vld [vmem:[#allocation7 + $0xf8] sm:$0xff]
    %600 = vmatpush.msra.mxu0 %v583
    %601 = vmatpush.msra.mxu0 %v582
    %602 = vmatpush.msra.mxu0 %v581
    %603 = vmatpush.msra.mxu0 %v580
    %604 = vmatpush.msra.mxu0 %v579
    %605 = vmatpush.msra.mxu0 %v578
    %606 = vmatpush.msra.mxu0 %v577
    %607 = vmatpush.msra.mxu0 %v576
    %608 = vmatpush.msra.mxu0 %v575
    %609 = vmatpush.msra.mxu0 %v574
    %610 = vmatpush.msra.mxu0 %v573
    %611 = vmatpush.msra.mxu0 %v572
    %612 = vmatpush.msra.mxu0 %v571
    %613 = vmatpush.msra.mxu0 %v570
    %614 = vmatpush.msra.mxu0 %v569
    %615 = vmatpush.msra.mxu0 %v568
    %616 = vmatmul.f32.gmra.mxu0 %v566
    %v617 = vpop.f32.mrf.mxu0
    %v618 = vadd.f32 0.0, %v617
    %619 = vdwg.mxu0
    %620 = vmatpush.msra.mxu0 %v599
    %621 = vmatpush.msra.mxu0 %v598
    %622 = vmatpush.msra.mxu0 %v597
    %623 = vmatpush.msra.mxu0 %v596
    %624 = vmatpush.msra.mxu0 %v595
    %625 = vmatpush.msra.mxu0 %v594
    %626 = vmatpush.msra.mxu0 %v593
    %627 = vmatpush.msra.mxu0 %v592
    %628 = vmatpush.msra.mxu0 %v591
    %629 = vmatpush.msra.mxu0 %v590
    %630 = vmatpush.msra.mxu0 %v589
    %631 = vmatpush.msra.mxu0 %v588
    %632 = vmatpush.msra.mxu0 %v587
    %633 = vmatpush.msra.mxu0 %v586
    %634 = vmatpush.msra.mxu0 %v585
    %635 = vmatpush.msra.mxu0 %v584
    %636 = vmatmul.f32.gmra.mxu0 %v567
    %v637 = vpop.f32.mrf.mxu0
    %v638 = vadd.f32 %v618, %v637
    %639 = vdwg.mxu0
    %v640 = vmax.f32 %v638, 0.0
    %v641 = vld [vmem:[#allocation8] sm:$0xff]
    %v642 = vld [vmem:[#allocation8 + $0x8] sm:$0xff]
    %v643 = vld [vmem:[#allocation8 + $0x10] sm:$0xff]
    %v644 = vld [vmem:[#allocation8 + $0x18] sm:$0xff]
    %v645 = vld [vmem:[#allocation8 + $0x20] sm:$0xff]
    %v646 = vld [vmem:[#allocation8 + $0x28] sm:$0xff]
    %v647 = vld [vmem:[#allocation8 + $0x30] sm:$0xff]
    %v648 = vld [vmem:[#allocation8 + $0x38] sm:$0xff]
    %v649 = vld [vmem:[#allocation8 + $0x40] sm:$0xff]
    %v650 = vld [vmem:[#allocation8 + $0x48] sm:$0xff]
    %v651 = vld [vmem:[#allocation8 + $0x50] sm:$0xff]
    %v652 = vld [vmem:[#allocation8 + $0x58] sm:$0xff]
    %v653 = vld [vmem:[#allocation8 + $0x60] sm:$0xff]
    %v654 = vld [vmem:[#allocation8 + $0x68] sm:$0xff]
    %v655 = vld [vmem:[#allocation8 + $0x70] sm:$0xff]
    %v656 = vld [vmem:[#allocation8 + $0x78] sm:$0xff]
    %657 = vmatpush.msra.mxu0 %v656
    %658 = vmatpush.msra.mxu0 %v655
    %659 = vmatpush.msra.mxu0 %v654
    %660 = vmatpush.msra.mxu0 %v653
    %661 = vmatpush.msra.mxu0 %v652
    %662 = vmatpush.msra.mxu0 %v651
    %663 = vmatpush.msra.mxu0 %v650
    %664 = vmatpush.msra.mxu0 %v649
    %665 = vmatpush.msra.mxu0 %v648
    %666 = vmatpush.msra.mxu0 %v647
    %667 = vmatpush.msra.mxu0 %v646
    %668 = vmatpush.msra.mxu0 %v645
    %669 = vmatpush.msra.mxu0 %v644
    %670 = vmatpush.msra.mxu0 %v643
    %671 = vmatpush.msra.mxu0 %v642
    %672 = vmatpush.msra.mxu0 %v641
    %673 = vmatmul.f32.gmra.mxu0 %v640
    %v674 = vpop.f32.mrf.mxu0
    %v675 = vadd.f32 0.0, %v674
    %676 = vdwg.mxu0
    %v677 = vlaneseq
    %v678 = vand.u32 %v677, 127
    %vm679 = vcmp.lt.s32.totalorder %v678, 10
    %v680 = vsel %vm679, %v675, -1e+30
    %681 = vmax.xlane.f32.xlu0 %v680
    %v682 = vpop.xlane.xlu0 %681
    %v683 = vsub.f32 %v680, %v682
    %v684 = vmul.f32 %v683, 1.442695
    %v685 = vpow.pop %v684
    %686 = vadd.xlane.f32.xlu0 %v685
    %v687 = vpop.xlane.xlu0 %686
    %v688 = vlog2.pop %v687
    %v689 = vmul.f32 %v688, 0.6931472
    %v690 = vsub.f32 %v683, %v689
    %691 = vst [vmem:[#allocation10] sm:$0xff] %v690
    // Predicated region
    $region34: #{net_forward.1} parent=1 // pred_check
      _
    $region35: #{net_forward.1} parent=1 // pred_check_branch
      %693 = sbr.rel (0) target = $region37
    $region36: #{net_forward.1} parent=1 // pred_region
      %695 = vsyncadd [#allocation4], 0
      %s697 = sshll.u32 [#allocation10], 4
      %s698 = int_to_ptr.vmem [resolvable:$true] %s697
      %s699 = sshll.u32 %s4, 4
      %s700 = int_to_ptr.hbm [resolvable:$true] %s699
      %702 = dma.vmem_to_hbm [thread:$0]  %s698, 128, %s700, [#allocation4]
    $region37: #{net_forward.1} parent=1 // pred_fallthru
      _
    // Predicated region
    $region38: #{net_forward.1} parent=1 // pred_check
      _
    $region39: #{net_forward.1} parent=1 // pred_check_branch
      %704 = sbr.rel (0) target = $region41
    $region40: #{net_forward.1} parent=1 // pred_region
      %706 = dma.done [#allocation4], 128
    $region41: #{net_forward.1} parent=1 // pred_fallthru
      _
    %707 = vsyncpa [#allocation3], 1
    %708 = vsyncpa [#allocation6], 1
    %709 = vsyncpa [#allocation9], 1
    %710 = vsyncpa [#allocation4], 1

</llo_original>
